<compile_context>
chip_gen: v7x
topology: tpu7x:2x2x1
jax: 0.10.0
libtpu: 0.0.40
codegen_flags: <defaults>
</compile_context>

<pallas_src>
import functools

import numpy as np
import jax
import jax.numpy as jnp
from jax.experimental import pallas as pl
from jax.experimental.pallas import tpu as pltpu

LANES = 128


def _round_up(x, mult):
    return ((x + mult - 1) // mult) * mult


def _sublane_for(dtype):
    return {4: 8, 2: 16, 1: 32}.get(jnp.dtype(dtype).itemsize, 8)


def _elementwise_loss(p, y, *, weight, tp_w, tn_w, fp_w, fn_w,
                      assume_binary, low_precision_transcendentals):
    """Elementwise cost-sensitive loss. p, y are f32 tiles; weights are python floats."""
    eps = jnp.float32(1e-08)

    # max(p, 1-p) - p  ==  relu(1 - 2p)   (one fewer VALU op, same value)
    arg = jnp.maximum(1.0 - 2.0 * p, 0.0) * jnp.float32(weight)
    if low_precision_transcendentals:
        t = jnp.tanh(arg.astype(jnp.bfloat16)).astype(jnp.float32)
    else:
        t = jnp.tanh(arg)

    one_m_t = 1.0 - t
    a_tp = 1.0 + (p - 1.0) * one_m_t + eps
    a_fp = 1.0 - p * one_m_t + eps
    a_tn = 1.0 - p * t + eps
    a_fn = 1.0 + (p - 1.0) * t + eps

    def _log(a):
        if low_precision_transcendentals:
            return jnp.log(a.astype(jnp.bfloat16)).astype(jnp.float32)
        return jnp.log(a)

    if assume_binary:
        # y is exactly {0, 1}: only 2 log() evaluations per element.
        pos = y > 0.5
        arg_a = jnp.where(pos, a_tp, a_fp)
        arg_b = jnp.where(pos, a_fn, a_tn)
        # weight selection as FMAs (valid because y in {0,1}); avoids vselects.
        w_a = fp_w + y * (tp_w - fp_w)
        w_b = tn_w + y * (fn_w - tn_w)
        return -(w_a * _log(arg_a) + w_b * _log(arg_b))

    # Exact module semantics (soft labels supported): 4 logs/element.
    tp = -y * _log(a_tp)
    fp = -(1.0 - y) * _log(a_fp)
    tn = -(1.0 - y) * _log(a_tn)
    fn = -y * _log(a_fn)
    return tp * tp_w + fp * fp_w + tn * tn_w + fn * fn_w


def _cs_loss_sum_kernel(yp_ref, yt_ref, out_ref, *, loss_kwargs, scale,
                        tile_rows, inner_steps, n_valid, has_tail):
    """Reduced path: (8,128)-aligned per-chunk partial sums, no map written to HBM."""
    c = pl.program_id(0)
    k = pl.program_id(1)

    @pl.when(k == 0)
    def _():
        out_ref[...] = jnp.zeros_like(out_ref)

    p = yp_ref[...].astype(jnp.float32)
    y = yt_ref[...].astype(jnp.float32)
    out = _elementwise_loss(p, y, **loss_kwargs)

    if has_tail:
        # Mask padded elements (flat index >= n_valid) out of the sum.
        row_base = (c * inner_steps + k) * tile_rows
        rows = jax.lax.broadcasted_iota(jnp.int32, out.shape, 0)
        lanes = jax.lax.broadcasted_iota(jnp.int32, out.shape, 1)
        flat = (row_base + rows) * LANES + lanes
        out = jnp.where(flat < n_valid, out, 0.0)

    # (tile_rows, 128) -> (tile_rows//8, 8, 128); summing the leading axis is
    # plain VPU vadds over whole (8,128) vregs — no masked stores, no XLU.
    out_ref[...] += jnp.sum(out.reshape(-1, 8, LANES), axis=0)

    if scale != 1.0:
        @pl.when(k == pl.num_programs(1) - 1)
        def _():
            # Fold the 'mean' division into the kernel epilogue.
            out_ref[...] = out_ref[...] * jnp.float32(scale)


def _cs_loss_map_kernel(yp_ref, yt_ref, out_ref, *, loss_kwargs):
    """Unreduced path: write the elementwise loss map (narrow dtype allowed)."""
    p = yp_ref[...].astype(jnp.float32)
    y = yt_ref[...].astype(jnp.float32)
    out = _elementwise_loss(p, y, **loss_kwargs)
    out_ref[...] = out.astype(out_ref.dtype)


def cost_sensitive_loss(y_pred, y_true, weight, cost_matrix, reduction="mean", *,
                        max_tile_rows=2048, assume_binary_labels=False,
                        low_precision_transcendentals=False, out_dtype=None):
    """Pallas implementation of CostSensitiveLoss.forward.

    y_pred / y_true: same-shape float arrays (e.g. NCHW [B, C, H, W]).
    weight: scalar float; cost_matrix: 2x2 ([1,1]=TP, [0,0]=TN, [0,1]=FP, [1,0]=FN).
    reduction: None | '' | 'mean' | 'sum'.
    assume_binary_labels: y_true in {0,1} -> only 2 logs/element (opt-in).
    low_precision_transcendentals: evaluate tanh/log in bf16 (v6e/v7x EUP), opt-in.
    out_dtype: dtype of the unreduced map (defaults to input dtype).
    """
    # Bake scalar parameters as compile-time constants (removes SMEM loads and
    # per-step scalar->vreg broadcasts).
    # TODO(synk): if weight/cost_matrix ever need to be traced (runtime-dynamic),
    # reintroduce the SMEM params path.
    cm = np.asarray(jax.device_get(jnp.asarray(cost_matrix, jnp.float32)))
    loss_kwargs = dict(
        weight=float(weight),
        tp_w=float(cm[1, 1]), tn_w=float(cm[0, 0]),
        fp_w=float(cm[0, 1]), fn_w=float(cm[1, 0]),
        assume_binary=bool(assume_binary_labels),
        low_precision_transcendentals=bool(low_precision_transcendentals),
    )

    orig_shape = y_pred.shape
    n = int(np.prod(orig_shape)) if len(orig_shape) else 1
    in_dtype = y_pred.dtype
    sublane = _sublane_for(in_dtype)
    m = pl.cdiv(n, LANES)                     # 128-lane rows needed (ceil)
    max_rows = max(_round_up(max_tile_rows, sublane), sublane)

    def _pad_and_reshape(x, m_pad, fill):
        flat = x.reshape(-1)
        pad = m_pad * LANES - n
        if pad:
            flat = jnp.pad(flat, (0, pad), constant_values=fill)
        return flat.reshape(m_pad, LANES)

    compiler_params = pltpu.CompilerParams  # alias

    if not reduction:
        # ---- Unreduced (elementwise map) path -------------------------------
        min_tiles = 2 if m >= 2 * sublane else 1       # >=2 steps for megacore
        tile_rows = min(max_rows, _round_up(pl.cdiv(m, min_tiles), sublane))
        num_tiles = pl.cdiv(m, tile_rows)
        m_pad = num_tiles * tile_rows

        # Keep original dtype across the HBM boundary; cast to f32 in-kernel.
        yp2 = _pad_and_reshape(y_pred, m_pad, 0.5)      # 0.5 keeps log args ~1
        yt2 = _pad_and_reshape(y_true, m_pad, 0.0)
        out_dt = jnp.dtype(out_dtype) if out_dtype is not None else in_dtype

        out_map = pl.pallas_call(
            functools.partial(_cs_loss_map_kernel, loss_kwargs=loss_kwargs),
            out_shape=jax.ShapeDtypeStruct((m_pad, LANES), out_dt),
            grid_spec=pltpu.PrefetchScalarGridSpec(
                num_scalar_prefetch=0,
                grid=(num_tiles,),
                in_specs=[
                    pl.BlockSpec((tile_rows, LANES), lambda i: (i, 0)),  # y_pred
                    pl.BlockSpec((tile_rows, LANES), lambda i: (i, 0)),  # y_true
                ],
                out_specs=pl.BlockSpec((tile_rows, LANES), lambda i: (i, 0)),
            ),
            compiler_params=compiler_params(
                dimension_semantics=("parallel",),
                vmem_limit_bytes=32 << 20),
        )(yp2, yt2)

        if m_pad * LANES != n:
            return out_map.reshape(-1)[:n].reshape(orig_shape)
        return out_map.reshape(orig_shape)

    if reduction not in ("mean", "sum"):
        raise ValueError(f"unknown reduction {reduction!r}")

    # ---- Reduced ('mean'/'sum') path: no elementwise map touches HBM --------
    # Leading 'parallel' chunk axis shards across TensorCores on v7x whenever
    # there are at least two sublane-aligned tiles of work; no-op on 1-TC chips.
    n_chunks = 2 if m >= 2 * sublane else 1
    rows_per_chunk = pl.cdiv(m, n_chunks)
    tile_rows = min(max_rows, _round_up(rows_per_chunk, sublane))
    inner_steps = pl.cdiv(rows_per_chunk, tile_rows)
    m_pad = n_chunks * inner_steps * tile_rows
    has_tail = (m_pad * LANES) != n

    yp2 = _pad_and_reshape(y_pred, m_pad, 0.5)
    yt2 = _pad_and_reshape(y_true, m_pad, 0.0)

    scale = (1.0 / float(n)) if reduction == "mean" else 1.0

    out_sum = pl.pallas_call(
        functools.partial(_cs_loss_sum_kernel,
                          loss_kwargs=loss_kwargs, scale=scale,
                          tile_rows=tile_rows, inner_steps=inner_steps,
                          n_valid=n, has_tail=has_tail),
        out_shape=jax.ShapeDtypeStruct((8 * n_chunks, LANES), jnp.float32),
        grid_spec=pltpu.PrefetchScalarGridSpec(
            num_scalar_prefetch=0,
            grid=(n_chunks, inner_steps),
            in_specs=[
                pl.BlockSpec((tile_rows, LANES),
                             lambda c, k: (c * inner_steps + k, 0)),   # y_pred
                pl.BlockSpec((tile_rows, LANES),
                             lambda c, k: (c * inner_steps + k, 0)),   # y_true
            ],
            # (8,128)-aligned per-chunk partial sum, resident across the
            # reduction axis (block index depends only on c).
            out_specs=pl.BlockSpec((8, LANES), lambda c, k: (c, 0)),
        ),
        compiler_params=compiler_params(
            dimension_semantics=("parallel", "arbitrary"),
            vmem_limit_bytes=32 << 20),
    )(yp2, yt2)

    # Tiny final sublane/lane/chunk combine (scale already applied in-kernel).
    return jnp.sum(out_sum)


def _reference(y_pred, y_true, weight, cost_matrix, reduction):
    eps = 1e-08
    p = jnp.asarray(y_pred, jnp.float32)
    y = jnp.asarray(y_true, jnp.float32)
    cm = jnp.asarray(cost_matrix, jnp.float32)
    t = jnp.tanh(weight * (jnp.maximum(p, 1.0 - p) - p))
    tp = -y * jnp.log(1.0 + (p - 1.0) * (1.0 - t) + eps)
    fp = -(1.0 - y) * jnp.log(1.0 + (-p) * (1.0 - t) + eps)
    tn = -(1.0 - y) * jnp.log(1.0 + (-p) * t + eps)
    fn = -y * jnp.log(1.0 + (p - 1.0) * t + eps)
    out = tp * cm[1, 1] + fp * cm[0, 1] + tn * cm[0, 0] + fn * cm[1, 0]
    if not reduction:
        return out
    if reduction == "mean":
        return out.mean()
    return out.sum()


if __name__ == "__main__":
    key = jax.random.PRNGKey(0)
    k1, k2, k3, k4 = jax.random.split(key, 4)

    weight = 5.0
    cost_matrix = jnp.array([[1.0, 3.0],
                             [4.0, 1.5]], jnp.float32)

    # ---- 128-lane-aligned NCHW inputs (sigmoid preds + binary labels) ----
    shape = (2, 4, 16, 16)
    y_pred = jax.nn.sigmoid(jax.random.normal(k1, shape, jnp.float32))
    y_true = (jax.random.uniform(k2, shape) > 0.5).astype(jnp.float32)

    loss_mean = jax.block_until_ready(
        cost_sensitive_loss(y_pred, y_true, weight, cost_matrix, "mean"))
    ref_mean = _reference(y_pred, y_true, weight, cost_matrix, "mean")
    assert jnp.allclose(loss_mean, ref_mean, rtol=1e-5, atol=1e-5), (loss_mean, ref_mean)

    loss_sum = jax.block_until_ready(
        cost_sensitive_loss(y_pred, y_true, weight, cost_matrix, "sum"))
    ref_sum = _reference(y_pred, y_true, weight, cost_matrix, "sum")
    assert jnp.allclose(loss_sum, ref_sum, rtol=1e-5, atol=1e-5), (loss_sum, ref_sum)

    out_map = jax.block_until_ready(
        cost_sensitive_loss(y_pred, y_true, weight, cost_matrix, reduction=None))
    ref_map = _reference(y_pred, y_true, weight, cost_matrix, None)
    assert out_map.shape == shape and out_map.dtype == y_pred.dtype
    assert jnp.allclose(out_map, ref_map, rtol=1e-5, atol=1e-5)

    # Binary-label fast path (2 logs/element) — labels here are exactly {0,1}.
    loss_bin = jax.block_until_ready(
        cost_sensitive_loss(y_pred, y_true, weight, cost_matrix, "mean",
                            assume_binary_labels=True))
    assert jnp.allclose(loss_bin, ref_mean, rtol=1e-5, atol=1e-5), (loss_bin, ref_mean)

    # ---- awkward, non-128-aligned shape exercises the padded/masked tail ----
    shape2 = (3, 5, 7, 11)   # 1155 elements, not a multiple of 128
    y_pred2 = jax.nn.sigmoid(jax.random.normal(k3, shape2, jnp.float32))
    y_true2 = (jax.random.uniform(k4, shape2) > 0.5).astype(jnp.float32)

    loss2 = jax.block_until_ready(
        cost_sensitive_loss(y_pred2, y_true2, weight, cost_matrix, "mean"))
    ref2 = _reference(y_pred2, y_true2, weight, cost_matrix, "mean")
    assert jnp.allclose(loss2, ref2, rtol=1e-5, atol=1e-5), (loss2, ref2)

    map2 = jax.block_until_ready(
        cost_sensitive_loss(y_pred2, y_true2, weight, cost_matrix, reduction=""))
    refm2 = _reference(y_pred2, y_true2, weight, cost_matrix, None)
    assert map2.shape == shape2
    assert jnp.allclose(map2, refm2, rtol=1e-5, atol=1e-5)

    # Narrow-output map (halves the HBM write stream); check shape/dtype only.
    map_bf16 = jax.block_until_ready(
        cost_sensitive_loss(y_pred, y_true, weight, cost_matrix, reduction=None,
                            out_dtype=jnp.bfloat16))
    assert map_bf16.shape == shape and map_bf16.dtype == jnp.bfloat16

    print("KERNEL_OK")
</pallas_src>

<mosaic_0001>
module attributes {stable_mosaic.version = 11 : i64} {
  func.func @_cs_loss_sum_kernel(%arg0: i32, %arg1: i32, %arg2: memref<8x128xf32, #tpu.memory_space<vmem>>, %arg3: memref<8x128xf32, #tpu.memory_space<vmem>>, %arg4: memref<8x128xf32, #tpu.memory_space<vmem>>) attributes {dimension_semantics = [#tpu.dimension_semantics<parallel>, #tpu.dimension_semantics<arbitrary>], iteration_bounds = array<i64: 2, 1>, scalar_prefetch = 0 : i64, scratch_operands = 0 : i64, tpu.core_type = #tpu.core_type<tc>, window_params = [{transform_indices = @transform_0, window_bounds = array<i64: 8, 128>}, {transform_indices = @transform_1, window_bounds = array<i64: 8, 128>}, {transform_indices = @transform_2, window_bounds = array<i64: 8, 128>}]} {
    %c0_i32 = arith.constant 0 : i32
    %0 = arith.cmpi eq, %arg1, %c0_i32 : i32
    %1 = arith.extui %0 : i1 to i32
    %c0_i32_0 = arith.constant 0 : i32
    %2 = arith.cmpi ne, %1, %c0_i32_0 : i32
    scf.if %2 {
      %cst_35 = arith.constant 0.000000e+00 : f32
      %79 = vector.broadcast %cst_35 : f32 to vector<8x128xf32>
      %c0_36 = arith.constant 0 : index
      %c0_37 = arith.constant 0 : index
      %80 = vector.load %arg4[%c0_36, %c0_37] : memref<8x128xf32, #tpu.memory_space<vmem>>, vector<8x128xf32>
      tpu.vector_store %arg4[%c0_36, %c0_37], %79 {strides = array<i32>} : memref<8x128xf32, #tpu.memory_space<vmem>>, vector<8x128xf32>,
    } else {
    }
    %c0 = arith.constant 0 : index
    %c0_1 = arith.constant 0 : index
    %3 = vector.load %arg2[%c0, %c0_1] : memref<8x128xf32, #tpu.memory_space<vmem>>, vector<8x128xf32>
    %c0_2 = arith.constant 0 : index
    %c0_3 = arith.constant 0 : index
    %4 = vector.load %arg3[%c0_2, %c0_3] : memref<8x128xf32, #tpu.memory_space<vmem>>, vector<8x128xf32>
    %cst = arith.constant 2.000000e+00 : f32
    %5 = vector.broadcast %cst : f32 to vector<8x128xf32>
    %6 = arith.mulf %5, %3 : vector<8x128xf32>
    %cst_4 = arith.constant 1.000000e+00 : f32
    %7 = vector.broadcast %cst_4 : f32 to vector<8x128xf32>
    %8 = arith.subf %7, %6 : vector<8x128xf32>
    %cst_5 = arith.constant 0.000000e+00 : f32
    %9 = vector.broadcast %cst_5 : f32 to vector<8x128xf32>
    %10 = arith.maximumf %8, %9 : vector<8x128xf32>
    %cst_6 = arith.constant 5.000000e+00 : f32
    %11 = vector.broadcast %cst_6 : f32 to vector<8x128xf32>
    %12 = arith.mulf %10, %11 : vector<8x128xf32>
    %13 = math.tanh %12 : vector<8x128xf32>
    %cst_7 = arith.constant 1.000000e+00 : f32
    %14 = vector.broadcast %cst_7 : f32 to vector<8x128xf32>
    %15 = arith.subf %14, %13 : vector<8x128xf32>
    %cst_8 = arith.constant 1.000000e+00 : f32
    %16 = vector.broadcast %cst_8 : f32 to vector<8x128xf32>
    %17 = arith.subf %3, %16 : vector<8x128xf32>
    %18 = arith.mulf %17, %15 : vector<8x128xf32>
    %cst_9 = arith.constant 1.000000e+00 : f32
    %19 = vector.broadcast %cst_9 : f32 to vector<8x128xf32>
    %20 = arith.addf %19, %18 : vector<8x128xf32>
    %cst_10 = arith.constant 9.99999993E-9 : f32
    %21 = vector.broadcast %cst_10 : f32 to vector<8x128xf32>
    %22 = arith.addf %20, %21 : vector<8x128xf32>
    %23 = arith.mulf %3, %15 : vector<8x128xf32>
    %cst_11 = arith.constant 1.000000e+00 : f32
    %24 = vector.broadcast %cst_11 : f32 to vector<8x128xf32>
    %25 = arith.subf %24, %23 : vector<8x128xf32>
    %cst_12 = arith.constant 9.99999993E-9 : f32
    %26 = vector.broadcast %cst_12 : f32 to vector<8x128xf32>
    %27 = arith.addf %25, %26 : vector<8x128xf32>
    %28 = arith.mulf %3, %13 : vector<8x128xf32>
    %cst_13 = arith.constant 1.000000e+00 : f32
    %29 = vector.broadcast %cst_13 : f32 to vector<8x128xf32>
    %30 = arith.subf %29, %28 : vector<8x128xf32>
    %cst_14 = arith.constant 9.99999993E-9 : f32
    %31 = vector.broadcast %cst_14 : f32 to vector<8x128xf32>
    %32 = arith.addf %30, %31 : vector<8x128xf32>
    %cst_15 = arith.constant 1.000000e+00 : f32
    %33 = vector.broadcast %cst_15 : f32 to vector<8x128xf32>
    %34 = arith.subf %3, %33 : vector<8x128xf32>
    %35 = arith.mulf %34, %13 : vector<8x128xf32>
    %cst_16 = arith.constant 1.000000e+00 : f32
    %36 = vector.broadcast %cst_16 : f32 to vector<8x128xf32>
    %37 = arith.addf %36, %35 : vector<8x128xf32>
    %cst_17 = arith.constant 9.99999993E-9 : f32
    %38 = vector.broadcast %cst_17 : f32 to vector<8x128xf32>
    %39 = arith.addf %37, %38 : vector<8x128xf32>
    %cst_18 = arith.constant 0.000000e+00 : f32
    %40 = vector.broadcast %cst_18 : f32 to vector<8x128xf32>
    %41 = arith.subf %40, %4 : vector<8x128xf32>
    %42 = math.log %22 : vector<8x128xf32>
    %43 = arith.mulf %41, %42 : vector<8x128xf32>
    %cst_19 = arith.constant 1.000000e+00 : f32
    %44 = vector.broadcast %cst_19 : f32 to vector<8x128xf32>
    %45 = arith.subf %44, %4 : vector<8x128xf32>
    %cst_20 = arith.constant 0.000000e+00 : f32
    %46 = vector.broadcast %cst_20 : f32 to vector<8x128xf32>
    %47 = arith.subf %46, %45 : vector<8x128xf32>
    %48 = math.log %27 : vector<8x128xf32>
    %49 = arith.mulf %47, %48 : vector<8x128xf32>
    %cst_21 = arith.constant 1.000000e+00 : f32
    %50 = vector.broadcast %cst_21 : f32 to vector<8x128xf32>
    %51 = arith.subf %50, %4 : vector<8x128xf32>
    %cst_22 = arith.constant 0.000000e+00 : f32
    %52 = vector.broadcast %cst_22 : f32 to vector<8x128xf32>
    %53 = arith.subf %52, %51 : vector<8x128xf32>
    %54 = math.log %32 : vector<8x128xf32>
    %55 = arith.mulf %53, %54 : vector<8x128xf32>
    %cst_23 = arith.constant 0.000000e+00 : f32
    %56 = vector.broadcast %cst_23 : f32 to vector<8x128xf32>
    %57 = arith.subf %56, %4 : vector<8x128xf32>
    %58 = math.log %39 : vector<8x128xf32>
    %59 = arith.mulf %57, %58 : vector<8x128xf32>
    %cst_24 = arith.constant 1.500000e+00 : f32
    %60 = vector.broadcast %cst_24 : f32 to vector<8x128xf32>
    %61 = arith.mulf %43, %60 : vector<8x128xf32>
    %cst_25 = arith.constant 3.000000e+00 : f32
    %62 = vector.broadcast %cst_25 : f32 to vector<8x128xf32>
    %63 = arith.mulf %49, %62 : vector<8x128xf32>
    %64 = arith.addf %61, %63 : vector<8x128xf32>
    %cst_26 = arith.constant 1.000000e+00 : f32
    %65 = vector.broadcast %cst_26 : f32 to vector<8x128xf32>
    %66 = arith.mulf %55, %65 : vector<8x128xf32>
    %67 = arith.addf %64, %66 : vector<8x128xf32>
    %cst_27 = arith.constant 4.000000e+00 : f32
    %68 = vector.broadcast %cst_27 : f32 to vector<8x128xf32>
    %69 = arith.mulf %59, %68 : vector<8x128xf32>
    %70 = arith.addf %67, %69 : vector<8x128xf32>
    %c0_28 = arith.constant 0 : index
    %c0_29 = arith.constant 0 : index
    %71 = vector.load %arg4[%c0_28, %c0_29] : memref<8x128xf32, #tpu.memory_space<vmem>>, vector<8x128xf32>
    %72 = vector.shape_cast %70 : vector<8x128xf32> to vector<1x8x128xf32>
    %cst_30 = arith.constant dense<0.000000e+00> : vector<8x128xf32>
    %73 = vector.multi_reduction <add>, %72, %cst_30 [0] : vector<1x8x128xf32> to vector<8x128xf32>
    %74 = arith.addf %71, %73 : vector<8x128xf32>
    %c0_31 = arith.constant 0 : index
    %c0_32 = arith.constant 0 : index
    %75 = vector.load %arg4[%c0_31, %c0_32] : memref<8x128xf32, #tpu.memory_space<vmem>>, vector<8x128xf32>
    tpu.vector_store %arg4[%c0_31, %c0_32], %74 {strides = array<i32>} : memref<8x128xf32, #tpu.memory_space<vmem>>, vector<8x128xf32>,
    %c0_i32_33 = arith.constant 0 : i32
    %76 = arith.cmpi eq, %arg1, %c0_i32_33 : i32
    %77 = arith.extui %76 : i1 to i32
    %c0_i32_34 = arith.constant 0 : i32
    %78 = arith.cmpi ne, %77, %c0_i32_34 : i32
    scf.if %78 {
      %c0_35 = arith.constant 0 : index
      %c0_36 = arith.constant 0 : index
      %79 = vector.load %arg4[%c0_35, %c0_36] : memref<8x128xf32, #tpu.memory_space<vmem>>, vector<8x128xf32>
      %cst_37 = arith.constant 4.8828125E-4 : f32
      %80 = vector.broadcast %cst_37 : f32 to vector<8x128xf32>
      %81 = arith.mulf %79, %80 : vector<8x128xf32>
      %c0_38 = arith.constant 0 : index
      %c0_39 = arith.constant 0 : index
      %82 = vector.load %arg4[%c0_38, %c0_39] : memref<8x128xf32, #tpu.memory_space<vmem>>, vector<8x128xf32>
      tpu.vector_store %arg4[%c0_38, %c0_39], %81 {strides = array<i32>} : memref<8x128xf32, #tpu.memory_space<vmem>>, vector<8x128xf32>,
    } else {
    }
    return
  }
  func.func @transform_0(%arg0: i32, %arg1: i32) -> (i32, i32) {
    %c1_i32 = arith.constant 1 : i32
    %0 = arith.muli %arg0, %c1_i32 : i32
    %1 = arith.addi %0, %arg1 : i32
    %c0_i32 = arith.constant 0 : i32
    %c0_i32_0 = arith.constant 0 : i32
    return %1, %c0_i32 : i32, i32
  }
  func.func @transform_1(%arg0: i32, %arg1: i32) -> (i32, i32) {
    %c1_i32 = arith.constant 1 : i32
    %0 = arith.muli %arg0, %c1_i32 : i32
    %1 = arith.addi %0, %arg1 : i32
    %c0_i32 = arith.constant 0 : i32
    %c0_i32_0 = arith.constant 0 : i32
    return %1, %c0_i32 : i32, i32
  }
  func.func @transform_2(%arg0: i32, %arg1: i32) -> (i32, i32) {
    %c0_i32 = arith.constant 0 : i32
    %c0_i32_0 = arith.constant 0 : i32
    return %arg0, %c0_i32 : i32, i32
  }
}

</mosaic_0001>

<llo_original>
// kernel: tpu_custom_call.1
$region0: #{tpu_custom_call.1}
  #allocation0 [shape = 'u32[]', space=smem, size = 0x4, offset = 0x4, fixed_abs, tag = 'smem constant byte address 0x4 - core index']
  #allocation1 [shape = 'u32[144,128]{1,0:T(1,128)}', space=vmem, size = 0x12000, scoped, tag = 'internal scratch']
  %s0 = inlined_call_operand.hbm [shape: f32[16,128], index: 0, kind: input, shape index: {}]
  %s1 = inlined_call_operand.hbm [shape: f32[16,128], index: 1, kind: input, shape index: {}]
  %s2 = inlined_call_operand.hbm [shape: f32[16,128], index: 2, kind: output, shape index: {}]
  %s3 = sld [smem:[#allocation0]]
  $region57: #{tpu_custom_call.1} parent=0
    _
  %s5 = ssub.s32 1, %s3
  %s6 = scalar_select 0, %s5, %s3
  $region1: #{tpu_custom_call.1} parent=0
    #allocation2 [shape = 'u8[8192]{0}', space=vmem, size = 0x2000, scoped, tag = 'input window, operand 0']
    #allocation3 [shape = 's32[2]{0}', space=sflag, size = 0x8, scoped, tag = 'scoped memory for tpu_custom_call.1']
    #allocation4 [shape = 's32[2]{0}', space=sflag, size = 0x8, scoped, tag = 'scoped memory for tpu_custom_call.1']
    #allocation5 [shape = 'u8[8192]{0}', space=vmem, size = 0x2000, scoped, tag = 'input window, operand 1']
    #allocation6 [shape = 's32[2]{0}', space=sflag, size = 0x8, scoped, tag = 'scoped memory for tpu_custom_call.1']
    #allocation7 [shape = 'u8[8192]{0}', space=vmem, size = 0x2000, scoped, tag = 'output window, operand 0']
    %7 = vsyncpa [#allocation3], 0
    %s8 = scalar_lea.sflag [#allocation3], 1
    %9 = vsyncpa %s8, 0
    %10 = vsyncpa [#allocation6], 0
    %s11 = scalar_lea.sflag [#allocation6], 1
    %12 = vsyncpa %s11, 0
    %13 = vsyncpa [#allocation4], 0
    %s14 = scalar_lea.sflag [#allocation4], 1
    %15 = vsyncpa %s14, 0
    loop: start=0, step=1, limit=4
    $region2: #{tpu_custom_call.1} parent=1 // loop_pre_header
      _
    $region3: #{tpu_custom_call.1} parent=1 // loop_header
      %s17 = sphi 0, %s21
      %p18 = scmp.ge.s32.totalorder %s17, 4
      %s24 = sphi 0, %s36
      %s25 = sphi 0, %s32
      %s26 = sphi 0, %s24
      %s27 = sphi 0, %s25
      %s28 = sphi 0, %s26
      %s29 = sphi 0, %s27
      %s41 = sphi 0, %s43
      %s44 = sphi 0, %s41
      %s45 = sphi 0, %s44
      %s61 = sphi 0, %s45
      %s69 = sphi 0, %s71
      %s72 = sphi 0, %s69
      %s73 = sphi 0, %s72
      %s89 = sphi 0, %s73
      %s95 = sphi 0, %s97
      %s98 = sphi 0, %s95
      %s99 = sphi 0, %s98
      %s115 = sphi 0, %s99
    $region4: #{tpu_custom_call.1} parent=1 // loop_header_branch
      %20 = sbr.rel (%p18) target = $region8
    $region5: #{tpu_custom_call.1} parent=1 // loop_body
      %s22 = ssub.s32 %s17, 1
      %s23 = ssub.s32 %s17, 2
      %s30 = sadd.s32 1, %s25
      %p31 = scmp.ge.s32.totalorder %s30, 1
      %s32 = scalar_select %p31, 0, %s30
      %s33 = sadd.s32 1, %s24
      %s34 = scalar_select %p31, %s33, %s24
      %p35 = scmp.ge.s32.totalorder %s34, 2
      %s36 = scalar_select %p35, 0, %s34
      %s37 = sadd.s32 %s24, %s25
      %s38 = sadd.s32 %s36, %s32
      %s39 = ssub.s32 %s37, %s38
      %p40 = scmp.eq.s32.totalorder %s39, 0
      %s42 = sadd.s32 %s41, 1
      %s43 = scalar_select %p40, %s41, %s42
      %p46 = pneg %p40
      %p47 = scmp.eq.s32.totalorder %s17, 1
      %p48 = por %p46, %p47
      %p49 = scmp.ne.s32.totalorder %s41, %s44
      %p50 = scmp.eq.s32.totalorder %s17, 0
      %p51 = por %p49, %p50
      %p52 = scmp.ne.s32.totalorder %s41, %s44
      %p53 = scmp.eq.s32.totalorder %s22, 1
      %p54 = por %p52, %p53
      %p55 = scmp.ne.s32.totalorder %s44, %s45
      %p56 = scmp.eq.s32.totalorder %s22, 0
      %p57 = por %p55, %p56
      %p58 = scmp.ne.s32.totalorder %s44, %s45
      %p59 = scmp.eq.s32.totalorder %s23, 1
      %p60 = por %p58, %p59
      %p62 = scmp.ne.s32.totalorder %s45, %s61
      %p63 = scmp.eq.s32.totalorder %s23, 0
      %p64 = por %p62, %p63
      %s65 = sadd.s32 %s24, %s25
      %s66 = sadd.s32 %s36, %s32
      %s67 = ssub.s32 %s65, %s66
      %p68 = scmp.eq.s32.totalorder %s67, 0
      %s70 = sadd.s32 %s69, 1
      %s71 = scalar_select %p68, %s69, %s70
      %p74 = pneg %p68
      %p75 = scmp.eq.s32.totalorder %s17, 1
      %p76 = por %p74, %p75
      %p77 = scmp.ne.s32.totalorder %s69, %s72
      %p78 = scmp.eq.s32.totalorder %s17, 0
      %p79 = por %p77, %p78
      %p80 = scmp.ne.s32.totalorder %s69, %s72
      %p81 = scmp.eq.s32.totalorder %s22, 1
      %p82 = por %p80, %p81
      %p83 = scmp.ne.s32.totalorder %s72, %s73
      %p84 = scmp.eq.s32.totalorder %s22, 0
      %p85 = por %p83, %p84
      %p86 = scmp.ne.s32.totalorder %s72, %s73
      %p87 = scmp.eq.s32.totalorder %s23, 1
      %p88 = por %p86, %p87
      %p90 = scmp.ne.s32.totalorder %s73, %s89
      %p91 = scmp.eq.s32.totalorder %s23, 0
      %p92 = por %p90, %p91
      %s93 = ssub.s32 %s24, %s36
      %p94 = scmp.eq.s32.totalorder %s93, 0
      %s96 = sadd.s32 %s95, 1
      %s97 = scalar_select %p94, %s95, %s96
      %p100 = pneg %p94
      %p101 = scmp.eq.s32.totalorder %s17, 1
      %p102 = por %p100, %p101
      %p103 = scmp.ne.s32.totalorder %s95, %s98
      %p104 = scmp.eq.s32.totalorder %s17, 0
      %p105 = por %p103, %p104
      %p106 = scmp.ne.s32.totalorder %s95, %s98
      %p107 = scmp.eq.s32.totalorder %s22, 1
      %p108 = por %p106, %p107
      %p109 = scmp.ne.s32.totalorder %s98, %s99
      %p110 = scmp.eq.s32.totalorder %s22, 0
      %p111 = por %p109, %p110
      %p112 = scmp.ne.s32.totalorder %s98, %s99
      %p113 = scmp.eq.s32.totalorder %s23, 1
      %p114 = por %p112, %p113
      %p116 = scmp.ne.s32.totalorder %s99, %s115
      %p117 = scmp.eq.s32.totalorder %s23, 0
      %p118 = por %p116, %p117
      %p119 = scmp.le.s32.totalorder 1, %s17
      %p120 = scmp.lt.s32.totalorder %s17, 3
      %p121 = pnand %p119, %p120
      %p122 = pneg %p121
      // Predicated region
      $region9: #{tpu_custom_call.1} parent=5 // pred_check
        _
      $region10: #{tpu_custom_call.1} parent=5 // pred_check_branch
        %124 = sbr.rel (%p121) target = $region12
      $region11: #{tpu_custom_call.1} parent=5 // pred_region
        %s125 = ssub.s32 %s17, 1
      $region12: #{tpu_custom_call.1} parent=5 // pred_fallthru
        _
      %p126 = scmp.lt.s32.totalorder %s17, 2
      // Predicated region
      $region13: #{tpu_custom_call.1} parent=5 // pred_check
        %p127 = pneg %p126
      $region14: #{tpu_custom_call.1} parent=5 // pred_check_branch
        %129 = sbr.rel (%p127) target = $region16
      $region15: #{tpu_custom_call.1} parent=5 // pred_region
        // Predicated region
        $region17: #{tpu_custom_call.1} parent=15 // pred_check
          %p130 = pneg %p51
        $region18: #{tpu_custom_call.1} parent=15 // pred_check_branch
          %132 = sbr.rel (%p130) target = $region20
        $region19: #{tpu_custom_call.1} parent=15 // pred_region
          %s133 = sand.u32 %s41, 1
          %s134 = scalar_lea.sflag [#allocation3], %s133
          %s135 = sand.u32 %s41, 1
          %s136 = smul.addr %s135, 8
          %s137 = scalar_lea.vmem [#allocation2], %s136
          %s138 = sadd.s32 %s24, %s25
          %s140 = ssub.s32 128, 128
          %141 = vsyncadd %s134, %s140
          %s142 = smul.addr %s138, 128
          %s143 = scalar_lea.hbm %s0, %s142
          %s145 = sshll.u32 %s137, 4
          %s146 = int_to_ptr.vmem [resolvable:$true] %s145
          %148 = dma.hbm_to_vmem [thread:$0]  %s143, 128, %s146, %s134
        $region20: #{tpu_custom_call.1} parent=15 // pred_fallthru
          _
        // Predicated region
        $region21: #{tpu_custom_call.1} parent=15 // pred_check
          %p149 = pneg %p79
        $region22: #{tpu_custom_call.1} parent=15 // pred_check_branch
          %151 = sbr.rel (%p149) target = $region24
        $region23: #{tpu_custom_call.1} parent=15 // pred_region
          %s152 = sand.u32 %s69, 1
          %s153 = scalar_lea.sflag [#allocation6], %s152
          %s154 = sand.u32 %s69, 1
          %s155 = smul.addr %s154, 8
          %s156 = scalar_lea.vmem [#allocation5], %s155
          %s157 = sadd.s32 %s24, %s25
          %s159 = ssub.s32 128, 128
          %160 = vsyncadd %s153, %s159
          %s161 = smul.addr %s157, 128
          %s162 = scalar_lea.hbm %s1, %s161
          %s164 = sshll.u32 %s156, 4
          %s165 = int_to_ptr.vmem [resolvable:$true] %s164
          %167 = dma.hbm_to_vmem [thread:$0]  %s162, 128, %s165, %s153
        $region24: #{tpu_custom_call.1} parent=15 // pred_fallthru
          _
      $region16: #{tpu_custom_call.1} parent=5 // pred_fallthru
        _
      %p168 = scmp.le.s32.totalorder 1, %s17
      %p169 = scmp.lt.s32.totalorder %s17, 3
      %p170 = pnand %p168, %p169
      %p171 = pneg %p170
      // Predicated region
      $region25: #{tpu_custom_call.1} parent=5 // pred_check
        _
      $region26: #{tpu_custom_call.1} parent=5 // pred_check_branch
        %173 = sbr.rel (%p170) target = $region28
      $region27: #{tpu_custom_call.1} parent=5 // pred_region
        %s174 = ssub.s32 %s17, 1
        %s175 = sand.u32 %s44, 1
        %s176 = scalar_lea.sflag [#allocation3], %s175
        %s177 = sand.u32 %s44, 1
        %s178 = smul.addr %s177, 8
        %s179 = scalar_lea.vmem [#allocation2], %s178
        // Predicated region
        $region29: #{tpu_custom_call.1} parent=27 // pred_check
          %p180 = pneg %p57
        $region30: #{tpu_custom_call.1} parent=27 // pred_check_branch
          %182 = sbr.rel (%p180) target = $region32
        $region31: #{tpu_custom_call.1} parent=27 // pred_region
          %183 = dma.done %s176, 128
        $region32: #{tpu_custom_call.1} parent=27 // pred_fallthru
          _
        %s184 = sand.u32 %s72, 1
        %s185 = scalar_lea.sflag [#allocation6], %s184
        %s186 = sand.u32 %s72, 1
        %s187 = smul.addr %s186, 8
        %s188 = scalar_lea.vmem [#allocation5], %s187
        // Predicated region
        $region33: #{tpu_custom_call.1} parent=27 // pred_check
          %p189 = pneg %p85
        $region34: #{tpu_custom_call.1} parent=27 // pred_check_branch
          %191 = sbr.rel (%p189) target = $region36
        $region35: #{tpu_custom_call.1} parent=27 // pred_region
          %192 = dma.done %s185, 128
        $region36: #{tpu_custom_call.1} parent=27 // pred_fallthru
          _
        %s193 = sand.u32 %s44, 1
        %s194 = scalar_lea.sflag [#allocation3], %s193
        %s195 = sand.u32 %s44, 1
        %s196 = smul.addr %s195, 8
        %s197 = scalar_lea.vmem [#allocation2], %s196
        %p198 = pneg %p57
        %p199 = pneg %p54
        %s200 = sand.u32 %s72, 1
        %s201 = scalar_lea.sflag [#allocation6], %s200
        %s202 = sand.u32 %s72, 1
        %s203 = smul.addr %s202, 8
        %s204 = scalar_lea.vmem [#allocation5], %s203
        %p205 = pneg %p85
        %p206 = pneg %p82
        %p207 = pneg %p111
        %p208 = pneg %p108
        %s209 = sand.u32 %s98, 1
        %s210 = scalar_lea.sflag [#allocation4], %s209
        %s211 = sand.u32 %s98, 1
        %s212 = smul.addr %s211, 8
        %s213 = scalar_lea.vmem [#allocation7], %s212
        %s214 = sadd.s32 %s26, %s27
        %s215 = sadd.s32 %s26, %s27
        %p216 = scmp.eq.s32.totalorder %s27, 0
        // Predicated region
        $region37: #{tpu_custom_call.1} parent=27 // pred_check
          %p217 = pneg %p216
        $region38: #{tpu_custom_call.1} parent=27 // pred_check_branch
          %219 = sbr.rel (%p217) target = $region40
        $region39: #{tpu_custom_call.1} parent=27 // pred_region
          %220 = vst [vmem:[%s213] sm:$0xff] 0.0
        $region40: #{tpu_custom_call.1} parent=27 // pred_fallthru
          _
        %v221 = vld [vmem:[%s179] sm:$0xff]
        %v222 = vld [vmem:[%s188] sm:$0xff]
        %v223 = vmul.f32 %v221, 2.0
        %v224 = vsub.f32 1.0, %v223
        %v225 = vmax.f32 %v224, 0.0
        %v226 = vmul.f32 %v225, 5.0
        %v227 = vtanh.pop %v226
        %v228 = vsub.f32 1.0, %v227
        %v229 = vsub.f32 %v221, 1.0
        %v230 = vmul.f32 %v229, %v228
        %v231 = vadd.f32 %v230, 1.0
        %v232 = vadd.f32 %v231, 1e-08
        %v233 = vmul.f32 %v221, %v228
        %v234 = vsub.f32 1.0, %v233
        %v235 = vadd.f32 %v234, 1e-08
        %v236 = vmul.f32 %v221, %v227
        %v237 = vsub.f32 1.0, %v236
        %v238 = vadd.f32 %v237, 1e-08
        %v239 = vmul.f32 %v229, %v227
        %v240 = vadd.f32 %v239, 1.0
        %v241 = vadd.f32 %v240, 1e-08
        %v242 = vsub.f32 0.0, %v222
        %v243 = vlog2.pop %v232
        %v244 = vmul.f32 %v243, 0.6931472
        %v245 = vmul.f32 %v242, %v244
        %v246 = vsub.f32 1.0, %v222
        %v247 = vsub.f32 0.0, %v246
        %v248 = vlog2.pop %v235
        %v249 = vmul.f32 %v248, 0.6931472
        %v250 = vmul.f32 %v247, %v249
        %v251 = vlog2.pop %v238
        %v252 = vmul.f32 %v251, 0.6931472
        %v253 = vmul.f32 %v247, %v252
        %v254 = vlog2.pop %v241
        %v255 = vmul.f32 %v254, 0.6931472
        %v256 = vmul.f32 %v242, %v255
        %v257 = vmul.f32 %v245, 1.5
        %v258 = vmul.f32 %v250, 3.0
        %v259 = vadd.f32 %v257, %v258
        %v260 = vadd.f32 %v259, %v253
        %v261 = vmul.f32 %v256, 4.0
        %v262 = vadd.f32 %v260, %v261
        %v263 = vld [vmem:[%s213] sm:$0xff]
        %v264 = vadd.f32 %v262, 0.0
        %v265 = vadd.f32 %v263, %v264
        %266 = vst [vmem:[%s213] sm:$0xff] %v265
        // Predicated region
        $region41: #{tpu_custom_call.1} parent=27 // pred_check
          %p267 = pneg %p216
        $region42: #{tpu_custom_call.1} parent=27 // pred_check_branch
          %269 = sbr.rel (%p267) target = $region44
        $region43: #{tpu_custom_call.1} parent=27 // pred_region
          %v270 = vld [vmem:[%s213] sm:$0xff]
          %v271 = vmul.f32 %v270, 0.00048828125
          %272 = vst [vmem:[%s213] sm:$0xff] %v271
        $region44: #{tpu_custom_call.1} parent=27 // pred_fallthru
          _
        %s273 = sand.u32 %s98, 1
        %s274 = scalar_lea.sflag [#allocation4], %s273
        %s275 = sand.u32 %s98, 1
        %s276 = smul.addr %s275, 8
        %s277 = scalar_lea.vmem [#allocation7], %s276
        // Predicated region
        $region45: #{tpu_custom_call.1} parent=27 // pred_check
          %p278 = pneg %p108
        $region46: #{tpu_custom_call.1} parent=27 // pred_check_branch
          %280 = sbr.rel (%p278) target = $region48
        $region47: #{tpu_custom_call.1} parent=27 // pred_region
          %s282 = ssub.s32 128, 128
          %283 = vsyncadd %s274, %s282
          %s284 = smul.addr %s26, 128
          %s285 = scalar_lea.hbm %s2, %s284
          %s287 = sshll.u32 %s277, 4
          %s288 = int_to_ptr.vmem [resolvable:$true] %s287
          %290 = dma.vmem_to_hbm [thread:$0]  %s288, 128, %s285, %s274
        $region48: #{tpu_custom_call.1} parent=27 // pred_fallthru
          _
      $region28: #{tpu_custom_call.1} parent=5 // pred_fallthru
        _
      %p291 = scmp.le.s32.totalorder 2, %s17
      // Predicated region
      $region49: #{tpu_custom_call.1} parent=5 // pred_check
        %p292 = pneg %p291
      $region50: #{tpu_custom_call.1} parent=5 // pred_check_branch
        %294 = sbr.rel (%p292) target = $region52
      $region51: #{tpu_custom_call.1} parent=5 // pred_region
        %s295 = ssub.s32 %s17, 2
        // Predicated region
        $region53: #{tpu_custom_call.1} parent=51 // pred_check
          %p296 = pneg %p114
        $region54: #{tpu_custom_call.1} parent=51 // pred_check_branch
          %298 = sbr.rel (%p296) target = $region56
        $region55: #{tpu_custom_call.1} parent=51 // pred_region
          %s299 = sand.u32 %s99, 1
          %s300 = scalar_lea.sflag [#allocation4], %s299
          %s301 = sand.u32 %s99, 1
          %s302 = smul.addr %s301, 8
          %s303 = scalar_lea.vmem [#allocation7], %s302
          %304 = dma.done %s300, 128
        $region56: #{tpu_custom_call.1} parent=51 // pred_fallthru
          _
      $region52: #{tpu_custom_call.1} parent=5 // pred_fallthru
        _
    $region6: #{tpu_custom_call.1} parent=1 // loop_footer
      %s21 = sadd.s32 1, %s17
    $region7: #{tpu_custom_call.1} parent=1 // loop_footer_branch
      %16 = sbr.rel target = $region3
    $region8: #{tpu_custom_call.1} parent=1 // loop_exit
      _
    %305 = vsyncpa [#allocation3], 1
    %s306 = scalar_lea.sflag [#allocation3], 1
    %307 = vsyncpa %s306, 1
    %308 = vsyncpa [#allocation6], 1
    %s309 = scalar_lea.sflag [#allocation6], 1
    %310 = vsyncpa %s309, 1
    %311 = vsyncpa [#allocation4], 1
    %s312 = scalar_lea.sflag [#allocation4], 1
    %313 = vsyncpa %s312, 1

</llo_original>
